<compile_context>
chip_gen: v6e
topology: v6e:2x2x1
jax: 0.10.0
libtpu: 0.0.40
codegen_flags: <defaults>
</compile_context>

<pallas_src>
import functools

import jax
import jax.numpy as jnp
from jax.experimental import pallas as pl
from jax.experimental.pallas import tpu as pltpu

_MIB = 1024 * 1024


def _round_up(x, m):
    return (x + m - 1) // m * m


def _cdiv(a, b):
    return (a + b - 1) // b


def _vmem_capacity_bytes():
    """Physical VMEM of the attached TPU; conservative fallback if unknown."""
    try:
        return int(pltpu.get_tpu_info().vmem_capacity_bytes)
    except Exception:
        return 64 * _MIB  # assume the smallest (v7x per-TC)


# ----------------------------------------------------------------------------
# Kernels
# ----------------------------------------------------------------------------
def _resident_kernel(x_ref, w1_ref, b1_ref, w2_ref, b2_ref, o_ref):
    """o = gelu(x@w1 + b1)@w2 + b2 + x with the whole hidden dim resident."""
    xb = x_ref[...].astype(jnp.bfloat16)                                 # (tm, Dp)
    h = jnp.dot(xb, w1_ref[...], preferred_element_type=jnp.float32)     # (tm, Hp)
    h = jax.nn.gelu(h + b1_ref[...])                                     # f32, tanh GELU
    y = jnp.dot(h.astype(jnp.bfloat16), w2_ref[...],
                preferred_element_type=jnp.float32)                      # (tm, Dp)
    y = y + b2_ref[...] + x_ref[...].astype(jnp.float32)                 # residual in f32
    o_ref[...] = y.astype(o_ref.dtype)


def _tiled_kernel(x_ref, w1_ref, b1_ref, w2_ref, b2_ref, o_ref, xb_ref,
                  *opt_acc, acc_in_out):
    """One (row-tile i, hidden-tile hk) step; hidden dim is the reduction axis.

    acc_in_out=True  -> accumulate directly into the resident f32 output block.
    acc_in_out=False -> accumulate into an f32 VMEM scratch (opt_acc[0]).
    """
    acc_ref = o_ref if acc_in_out else opt_acc[0]
    hk = pl.program_id(1)

    @pl.when(hk == 0)
    def _init():
        xb_ref[...] = x_ref[...].astype(jnp.bfloat16)   # cast once per row tile
        acc_ref[...] = jnp.zeros_like(acc_ref)

    h = jnp.dot(xb_ref[...], w1_ref[...], preferred_element_type=jnp.float32)
    h = jax.nn.gelu(h + b1_ref[...])
    acc_ref[...] += jnp.dot(h.astype(jnp.bfloat16), w2_ref[...],
                            preferred_element_type=jnp.float32)

    @pl.when(hk == pl.num_programs(1) - 1)
    def _finalize():
        y = acc_ref[...] + b2_ref[...] + x_ref[...].astype(jnp.float32)
        o_ref[...] = y.astype(o_ref.dtype)


# ----------------------------------------------------------------------------
# Planning (generation-aware tile sizes)
# ----------------------------------------------------------------------------
def _plan_tiles(M, Dp, Hp, x_itemsize, out_itemsize, tm=None, th=None):
    """Pick (tm, th, resident, acc_in_out, vmem_limit) from the chip's VMEM."""
    vmem = _vmem_capacity_bytes()
    big_vmem = vmem >= 100 * _MIB              # v5e/v6e (128 MiB); else v7x (64 MiB/TC)
    cap = (100 if big_vmem else 52) * _MIB     # headroom for Mosaic internal scratch

    acc_in_out = (out_itemsize == 4)           # f32 out: accumulate into o_ref directly

    if tm is None:
        tm = 1024 if big_vmem else 512
    tm = max(8, min(_round_up(tm, 8), _round_up(M, 8)))
    if not big_vmem and M > 16:
        # v7x has 2 TensorCores: keep >= 2 row tiles so the "parallel" axis
        # actually feeds both cores.
        tm = min(tm, _round_up(_cdiv(M, 2), 8))
    # Re-balance so padded rows stay < 8 per tile.
    n_tiles = _cdiv(M, tm)
    tm = _round_up(_cdiv(M, n_tiles), 8)

    def resident_bytes(tm_):
        act = 2 * tm_ * Dp * (x_itemsize + out_itemsize)       # x + out, double-buffered
        wts = 2 * (2 * Dp * Hp * 2 + Hp * 4 + Dp * 4)          # bf16 w1+w2 (+biases)
        inter = tm_ * Hp * 4 + tm_ * Dp * 4                    # f32 h + matmul2 result
        return act + wts + inter

    def tiled_bytes(tm_, th_):
        act = 2 * tm_ * Dp * (x_itemsize + out_itemsize)
        wts = 2 * (2 * Dp * th_ * 2 + th_ * 4 + Dp * 4)
        scratch = tm_ * Dp * 2 + (0 if acc_in_out else tm_ * Dp * 4)
        inter = tm_ * th_ * 4 + tm_ * Dp * 4
        return act + wts + scratch + inter

    # Resident-weights fast path: whole hidden dim in VMEM, weights DMA'd once.
    if th is None and resident_bytes(tm) <= cap:
        return tm, Hp, True, acc_in_out, cap

    # Tiled-hidden fallback: shrink th (then tm) until the working set fits.
    if th is not None:
        th = max(128, min(_round_up(th, 128), Hp))
        while Hp % th:
            th -= 128
        cands = [th]
    else:
        cands = [c for c in (1024, 512, 256, 128) if c <= Hp and Hp % c == 0]
        if not cands:
            cands = [Hp]
    tm_ = tm
    while True:
        for c in cands:
            if tiled_bytes(tm_, c) <= cap:
                return tm_, c, (c == Hp), acc_in_out, cap
        if tm_ <= 8:
            return tm_, cands[-1], (cands[-1] == Hp), acc_in_out, cap
        tm_ = max(8, _round_up(tm_ // 2, 8))


# ----------------------------------------------------------------------------
# pallas_call wrapper
# ----------------------------------------------------------------------------
@functools.partial(jax.jit, static_argnames=(
    "M", "Mp", "D", "Dp", "Hp", "tm", "th", "resident", "acc_in_out",
    "vmem_limit"))
def _residual_ffn_call(x, w1p, b1p, w2p, b2p, *, M, Mp, D, Dp, Hp, tm, th,
                       resident, acc_in_out, vmem_limit):
    B, S, _ = x.shape
    out_dtype = x.dtype
    x2 = x.reshape(M, D)
    if (Mp, Dp) != (M, D):
        x2 = jnp.pad(x2, ((0, Mp - M), (0, Dp - D)))

    grid0 = Mp // tm

    if resident:
        grid = (grid0,)
        in_specs = [
            pl.BlockSpec((tm, Dp), lambda i: (i, 0)),    # x row tile
            pl.BlockSpec((Dp, Hp), lambda i: (0, 0)),    # w1, constant -> DMA'd once
            pl.BlockSpec((1, Hp), lambda i: (0, 0)),     # b1
            pl.BlockSpec((Hp, Dp), lambda i: (0, 0)),    # w2, constant -> DMA'd once
            pl.BlockSpec((1, Dp), lambda i: (0, 0)),     # b2
        ]
        out_specs = pl.BlockSpec((tm, Dp), lambda i: (i, 0))
        scratch_shapes = []
        kernel = _resident_kernel
        dims = ("parallel",)
        weight_bytes = (w1p.size + w2p.size) * 2 + (b1p.size + b2p.size) * 4
    else:
        grid = (grid0, Hp // th)
        in_specs = [
            pl.BlockSpec((tm, Dp), lambda i, hk: (i, 0)),    # x rows (reused over hk)
            pl.BlockSpec((Dp, th), lambda i, hk: (0, hk)),   # w1 hidden tile
            pl.BlockSpec((1, th), lambda i, hk: (0, hk)),    # b1 hidden tile
            pl.BlockSpec((th, Dp), lambda i, hk: (hk, 0)),   # w2 hidden tile
            pl.BlockSpec((1, Dp), lambda i, hk: (0, 0)),     # b2 (resident)
        ]
        out_specs = pl.BlockSpec((tm, Dp), lambda i, hk: (i, 0))
        scratch_shapes = [pltpu.VMEM((tm, Dp), jnp.bfloat16)]     # bf16 x, cast once
        if not acc_in_out:
            scratch_shapes.append(pltpu.VMEM((tm, Dp), jnp.float32))
        kernel = functools.partial(_tiled_kernel, acc_in_out=acc_in_out)
        dims = ("parallel", "arbitrary")
        # weights are re-streamed once per row tile on this path
        weight_bytes = ((w1p.size + w2p.size) * 2 + b1p.size * 4) * grid0 + b2p.size * 4

    x_bytes = Mp * Dp * x2.dtype.itemsize
    out_bytes = Mp * Dp * jnp.dtype(out_dtype).itemsize
    cost = pl.CostEstimate(
        flops=4 * Mp * Dp * Hp,                       # two matmuls
        transcendentals=Mp * Hp,                      # tanh-GELU per hidden element
        bytes_accessed=int(x_bytes + out_bytes + weight_bytes),
    )

    out = pl.pallas_call(
        kernel,
        out_shape=jax.ShapeDtypeStruct((Mp, Dp), out_dtype),
        grid_spec=pltpu.PrefetchScalarGridSpec(
            num_scalar_prefetch=0,
            grid=grid,
            in_specs=in_specs,
            out_specs=out_specs,
            scratch_shapes=scratch_shapes,
        ),
        compiler_params=pltpu.CompilerParams(
            dimension_semantics=dims,
            vmem_limit_bytes=int(vmem_limit),
        ),
        cost_estimate=cost,
    )(x2, w1p, b1p, w2p, b2p)

    if (Mp, Dp) != (M, D):
        out = out[:M, :D]
    return out.reshape(B, S, D)


def make_residual_ffn(w1, b1, w2, b2):
    """One-time parameter prep (pad to lane multiples, cast weights to bf16).

    Returns apply(x, tm=None, th=None) computing Residual(FeedForward)(x) =
    gelu(x @ w1 + b1) @ w2 + b2 + x   for x of shape [B, S, D].
    """
    D, H = w1.shape
    Dp = _round_up(D, 128)
    Hp = _round_up(H, 128)
    w1p = jnp.pad(jnp.asarray(w1), ((0, Dp - D), (0, Hp - H))).astype(jnp.bfloat16)
    w2p = jnp.pad(jnp.asarray(w2), ((0, Hp - H), (0, Dp - D))).astype(jnp.bfloat16)
    b1p = jnp.pad(jnp.asarray(b1, jnp.float32).reshape(1, H), ((0, 0), (0, Hp - H)))
    b2p = jnp.pad(jnp.asarray(b2, jnp.float32).reshape(1, D), ((0, 0), (0, Dp - D)))

    def apply(x, tm=None, th=None):
        B, S, Dx = x.shape
        assert Dx == D, f"expected last dim {D}, got {Dx}"
        M = B * S
        tm_, th_, resident, acc_in_out, vmem_limit = _plan_tiles(
            M, Dp, Hp, x.dtype.itemsize, x.dtype.itemsize, tm=tm, th=th)
        Mp = _round_up(M, tm_)
        return _residual_ffn_call(
            x, w1p, b1p, w2p, b2p, M=M, Mp=Mp, D=D, Dp=Dp, Hp=Hp,
            tm=tm_, th=th_, resident=resident, acc_in_out=acc_in_out,
            vmem_limit=vmem_limit)

    return apply


def residual_ffn(x, w1, b1, w2, b2, *, tm=None, th=None):
    """Convenience one-shot wrapper (prep + apply)."""
    return make_residual_ffn(w1, b1, w2, b2)(x, tm=tm, th=th)


# ----------------------------------------------------------------------------
# Reference + test harness
# ----------------------------------------------------------------------------
def _reference(x, w1, b1, w2, b2):
    """Pure-JAX emulation of the kernel's numerics (bf16 matmuls, f32 epilogue)."""
    B, S, D = x.shape
    xf = x.reshape(B * S, D).astype(jnp.float32)
    xb = xf.astype(jnp.bfloat16).astype(jnp.float32)
    w1b = w1.astype(jnp.bfloat16).astype(jnp.float32)
    w2b = w2.astype(jnp.bfloat16).astype(jnp.float32)
    h = xb @ w1b + b1.reshape(1, -1).astype(jnp.float32)
    h = jax.nn.gelu(h)
    hb = h.astype(jnp.bfloat16).astype(jnp.float32)
    y = hb @ w2b + b2.reshape(1, -1).astype(jnp.float32)
    return (y + xf).reshape(B, S, D).astype(x.dtype)


def _make_inputs(key, B, S, D, H):
    kx, k1, k2, k3, k4 = jax.random.split(key, 5)
    x = jax.random.normal(kx, (B, S, D), dtype=jnp.float32)
    w1 = jax.random.normal(k1, (D, H), dtype=jnp.float32) / jnp.sqrt(D)
    b1 = jax.random.normal(k2, (1, H), dtype=jnp.float32) * 0.01
    w2 = jax.random.normal(k3, (H, D), dtype=jnp.float32) / jnp.sqrt(H)
    b2 = jax.random.normal(k4, (1, D), dtype=jnp.float32) * 0.01
    return x, w1, b1, w2, b2


if __name__ == "__main__":
    key = jax.random.PRNGKey(0)
    k_a, k_b, k_c, k_d = jax.random.split(key, 4)

    # Config A: toy shapes -> exercises D/H/row padding on the resident path.
    xa, w1a, b1a, w2a, b2a = _make_inputs(k_a, B=2, S=8, D=32, H=64)
    ffn_a = make_residual_ffn(w1a, b1a, w2a, b2a)
    out_a = jax.block_until_ready(ffn_a(xa))
    ref_a = _reference(xa, w1a, b1a, w2a, b2a)
    assert out_a.shape == xa.shape and out_a.dtype == xa.dtype
    assert jnp.allclose(out_a, ref_a, atol=1e-2, rtol=1e-2), "config A mismatch"

    # Config B: lane-dense dims -> resident-weights fast path (1-D grid).
    xb_, w1b, b1b, w2b, b2b = _make_inputs(k_b, B=4, S=128, D=128, H=512)
    ffn_b = make_residual_ffn(w1b, b1b, w2b, b2b)
    out_b = jax.block_until_ready(ffn_b(xb_))
    ref_b = _reference(xb_, w1b, b1b, w2b, b2b)
    assert jnp.allclose(out_b, ref_b, atol=1e-2, rtol=1e-2), "config B mismatch"

    # Config C: force the tiled-hidden fallback; f32 output accumulates
    # directly into the resident output block (no acc scratch).
    xc, w1c, b1c, w2c, b2c = _make_inputs(k_c, B=2, S=64, D=128, H=512)
    ffn_c = make_residual_ffn(w1c, b1c, w2c, b2c)
    out_c = jax.block_until_ready(ffn_c(xc, th=128))
    ref_c = _reference(xc, w1c, b1c, w2c, b2c)
    assert jnp.allclose(out_c, ref_c, atol=1e-2, rtol=1e-2), "config C mismatch"

    # Config D: bf16 activations on the tiled path -> f32 VMEM accumulator.
    xd, w1d, b1d, w2d, b2d = _make_inputs(k_d, B=2, S=64, D=128, H=512)
    xd = xd.astype(jnp.bfloat16)
    ffn_d = make_residual_ffn(w1d, b1d, w2d, b2d)
    out_d = jax.block_until_ready(ffn_d(xd, th=128))
    ref_d = _reference(xd, w1d, b1d, w2d, b2d)
    assert out_d.dtype == jnp.bfloat16
    assert jnp.allclose(out_d.astype(jnp.float32), ref_d.astype(jnp.float32),
                        atol=6e-2, rtol=6e-2), "config D mismatch"

    print("KERNEL_OK")
</pallas_src>

<mosaic_0001>
module attributes {stable_mosaic.version = 11 : i64} {
  func.func @_resident_kernel(%arg0: i32, %arg1: memref<16x128xf32, #tpu.memory_space<vmem>>, %arg2: memref<128x128xbf16, #tpu.memory_space<vmem>>, %arg3: memref<1x128xf32, #tpu.memory_space<vmem>>, %arg4: memref<128x128xbf16, #tpu.memory_space<vmem>>, %arg5: memref<1x128xf32, #tpu.memory_space<vmem>>, %arg6: memref<16x128xf32, #tpu.memory_space<vmem>>) attributes {dimension_semantics = [#tpu.dimension_semantics<parallel>], iteration_bounds = array<i64: 1>, scalar_prefetch = 0 : i64, scratch_operands = 0 : i64, tpu.core_type = #tpu.core_type<tc>, window_params = [{transform_indices = @transform_0, window_bounds = array<i64: 16, 128>}, {pipeline_mode = #tpu.pipeline_mode<synchronous>, transform_indices = @transform_1, window_bounds = array<i64: 128, 128>}, {pipeline_mode = #tpu.pipeline_mode<synchronous>, transform_indices = @transform_2, window_bounds = array<i64: 1, 128>}, {pipeline_mode = #tpu.pipeline_mode<synchronous>, transform_indices = @transform_3, window_bounds = array<i64: 128, 128>}, {pipeline_mode = #tpu.pipeline_mode<synchronous>, transform_indices = @transform_4, window_bounds = array<i64: 1, 128>}, {transform_indices = @transform_5, window_bounds = array<i64: 16, 128>}]} {
    %c0 = arith.constant 0 : index
    %c0_0 = arith.constant 0 : index
    %0 = vector.load %arg1[%c0, %c0_0] : memref<16x128xf32, #tpu.memory_space<vmem>>, vector<16x128xf32>
    %1 = arith.truncf %0 : vector<16x128xf32> to vector<16x128xbf16>
    %c0_1 = arith.constant 0 : index
    %c0_2 = arith.constant 0 : index
    %2 = vector.load %arg2[%c0_1, %c0_2] : memref<128x128xbf16, #tpu.memory_space<vmem>>, vector<128x128xbf16>
    %cst = arith.constant dense<0.000000e+00> : vector<16x128xf32>
    %3 = tpu.matmul %1, %2, %cst {dimension_numbers = #tpu.dot_dimension_numbers<[1], [0], [0], [1], [0, 0, 1, 1], [], []>} : vector<16x128xbf16>, vector<128x128xbf16>, vector<16x128xf32> -> vector<16x128xf32>
    %c0_3 = arith.constant 0 : index
    %c0_4 = arith.constant 0 : index
    %4 = vector.load %arg3[%c0_3, %c0_4] : memref<1x128xf32, #tpu.memory_space<vmem>>, vector<1x128xf32>
    %5 = vector.broadcast %4 : vector<1x128xf32> to vector<16x128xf32>
    %6 = arith.addf %3, %5 : vector<16x128xf32>
    %7 = arith.mulf %6, %6 : vector<16x128xf32>
    %8 = arith.mulf %6, %7 : vector<16x128xf32>
    %cst_5 = arith.constant 4.471500e-02 : f32
    %9 = vector.broadcast %cst_5 : f32 to vector<16x128xf32>
    %10 = arith.mulf %9, %8 : vector<16x128xf32>
    %11 = arith.addf %6, %10 : vector<16x128xf32>
    %cst_6 = arith.constant 0.797884583 : f32
    %12 = vector.broadcast %cst_6 : f32 to vector<16x128xf32>
    %13 = arith.mulf %12, %11 : vector<16x128xf32>
    %14 = math.tanh %13 : vector<16x128xf32>
    %cst_7 = arith.constant 1.000000e+00 : f32
    %15 = vector.broadcast %cst_7 : f32 to vector<16x128xf32>
    %16 = arith.addf %15, %14 : vector<16x128xf32>
    %cst_8 = arith.constant 5.000000e-01 : f32
    %17 = vector.broadcast %cst_8 : f32 to vector<16x128xf32>
    %18 = arith.mulf %17, %16 : vector<16x128xf32>
    %19 = arith.mulf %6, %18 : vector<16x128xf32>
    %20 = arith.truncf %19 : vector<16x128xf32> to vector<16x128xbf16>
    %c0_9 = arith.constant 0 : index
    %c0_10 = arith.constant 0 : index
    %21 = vector.load %arg4[%c0_9, %c0_10] : memref<128x128xbf16, #tpu.memory_space<vmem>>, vector<128x128xbf16>
    %cst_11 = arith.constant dense<0.000000e+00> : vector<16x128xf32>
    %22 = tpu.matmul %20, %21, %cst_11 {dimension_numbers = #tpu.dot_dimension_numbers<[1], [0], [0], [1], [0, 0, 1, 1], [], []>} : vector<16x128xbf16>, vector<128x128xbf16>, vector<16x128xf32> -> vector<16x128xf32>
    %c0_12 = arith.constant 0 : index
    %c0_13 = arith.constant 0 : index
    %23 = vector.load %arg5[%c0_12, %c0_13] : memref<1x128xf32, #tpu.memory_space<vmem>>, vector<1x128xf32>
    %24 = vector.broadcast %23 : vector<1x128xf32> to vector<16x128xf32>
    %25 = arith.addf %22, %24 : vector<16x128xf32>
    %c0_14 = arith.constant 0 : index
    %c0_15 = arith.constant 0 : index
    %26 = vector.load %arg1[%c0_14, %c0_15] : memref<16x128xf32, #tpu.memory_space<vmem>>, vector<16x128xf32>
    %27 = arith.addf %25, %26 : vector<16x128xf32>
    %c0_16 = arith.constant 0 : index
    %c0_17 = arith.constant 0 : index
    %28 = vector.load %arg6[%c0_16, %c0_17] : memref<16x128xf32, #tpu.memory_space<vmem>>, vector<16x128xf32>
    tpu.vector_store %arg6[%c0_16, %c0_17], %27 {strides = array<i32>} : memref<16x128xf32, #tpu.memory_space<vmem>>, vector<16x128xf32>,
    return
  }
  func.func @transform_0(%arg0: i32) -> (i32, i32) {
    %c0_i32 = arith.constant 0 : i32
    %c0_i32_0 = arith.constant 0 : i32
    return %arg0, %c0_i32 : i32, i32
  }
  func.func @transform_1(%arg0: i32) -> (i32, i32) {
    %c0_i32 = arith.constant 0 : i32
    %c0_i32_0 = arith.constant 0 : i32
    %c0_i32_1 = arith.constant 0 : i32
    return %c0_i32, %c0_i32_0 : i32, i32
  }
  func.func @transform_2(%arg0: i32) -> (i32, i32) {
    %c0_i32 = arith.constant 0 : i32
    %c0_i32_0 = arith.constant 0 : i32
    %c0_i32_1 = arith.constant 0 : i32
    return %c0_i32, %c0_i32_0 : i32, i32
  }
  func.func @transform_3(%arg0: i32) -> (i32, i32) {
    %c0_i32 = arith.constant 0 : i32
    %c0_i32_0 = arith.constant 0 : i32
    %c0_i32_1 = arith.constant 0 : i32
    return %c0_i32, %c0_i32_0 : i32, i32
  }
  func.func @transform_4(%arg0: i32) -> (i32, i32) {
    %c0_i32 = arith.constant 0 : i32
    %c0_i32_0 = arith.constant 0 : i32
    %c0_i32_1 = arith.constant 0 : i32
    return %c0_i32, %c0_i32_0 : i32, i32
  }
  func.func @transform_5(%arg0: i32) -> (i32, i32) {
    %c0_i32 = arith.constant 0 : i32
    %c0_i32_0 = arith.constant 0 : i32
    return %arg0, %c0_i32 : i32, i32
  }
}

</mosaic_0001>

<llo_original>
// kernel: _residual_ffn_call.1
$region0: #{_residual_ffn_call.1}
  #allocation0 [shape = 'u32[]', space=smem, size = 0x4, offset = 0x4, fixed_abs, tag = 'smem constant byte address 0x4 - core index']
  #allocation1 [shape = 'u32[144,128]{1,0:T(1,128)}', space=vmem, size = 0x12000, scoped, tag = 'internal scratch']
  %s0 = inlined_call_operand.vmem [shape: f32[16,128], index: 0, kind: input, shape index: {}]
  %s1 = inlined_call_operand.hbm [shape: bf16[128,128], index: 1, kind: input, shape index: {}]
  %s2 = inlined_call_operand.vmem [shape: f32[1,128], index: 2, kind: input, shape index: {}]
  %s3 = inlined_call_operand.hbm [shape: bf16[128,128], index: 3, kind: input, shape index: {}]
  %s4 = inlined_call_operand.vmem [shape: f32[1,128], index: 4, kind: input, shape index: {}]
  %s5 = inlined_call_operand.vmem [shape: f32[16,128], index: 5, kind: output, shape index: {}]
  %s6 = sld [smem:[#allocation0]]
  $region38: #{_residual_ffn_call.1} parent=0
    _
  %s8 = ssub.s32 1, %s6
  %s9 = scalar_select 0, %s8, %s6
  $region1: #{_residual_ffn_call.1} parent=0
    #allocation2 [shape = 'u8[32768]{0}', space=vmem, size = 0x8000, scoped, tag = 'input window, operand 1, single buffered']
    #allocation3 [shape = 's32[1]{0}', space=sflag, size = 0x4, scoped, tag = 'scoped memory for _residual_ffn_call.1']
    #allocation4 [shape = 'u8[32768]{0}', space=vmem, size = 0x8000, scoped, tag = 'input window, operand 3, single buffered']
    #allocation5 [shape = 's32[1]{0}', space=sflag, size = 0x4, scoped, tag = 'scoped memory for _residual_ffn_call.1']
    %10 = vsyncpa [#allocation3], 0
    %11 = vsyncpa [#allocation5], 0
    // Predicated region
    $region2: #{_residual_ffn_call.1} parent=1 // pred_check
      _
    $region3: #{_residual_ffn_call.1} parent=1 // pred_check_branch
      %13 = sbr.rel (0) target = $region5
    $region4: #{_residual_ffn_call.1} parent=1 // pred_region
      _
    $region5: #{_residual_ffn_call.1} parent=1 // pred_fallthru
      _
    // Predicated region
    $region6: #{_residual_ffn_call.1} parent=1 // pred_check
      _
    $region7: #{_residual_ffn_call.1} parent=1 // pred_check_branch
      %15 = sbr.rel (0) target = $region9
    $region8: #{_residual_ffn_call.1} parent=1 // pred_region
      %s17 = ssub.s32 1024, 1024
      %18 = vsyncadd [#allocation3], %s17
      %s19 = sshll.u32 [#allocation2], 4
      %s20 = int_to_ptr.vmem [resolvable:$true] %s19
      %25 = dma.hbm_to_vmem [thread:$0]  %s1, 1024, %s20, [#allocation3], 64, 64, 4
    $region9: #{_residual_ffn_call.1} parent=1 // pred_fallthru
      _
    // Predicated region
    $region10: #{_residual_ffn_call.1} parent=1 // pred_check
      _
    $region11: #{_residual_ffn_call.1} parent=1 // pred_check_branch
      %27 = sbr.rel (0) target = $region13
    $region12: #{_residual_ffn_call.1} parent=1 // pred_region
      _
    $region13: #{_residual_ffn_call.1} parent=1 // pred_fallthru
      _
    // Predicated region
    $region14: #{_residual_ffn_call.1} parent=1 // pred_check
      _
    $region15: #{_residual_ffn_call.1} parent=1 // pred_check_branch
      %29 = sbr.rel (0) target = $region17
    $region16: #{_residual_ffn_call.1} parent=1 // pred_region
      %s31 = ssub.s32 1024, 1024
      %32 = vsyncadd [#allocation5], %s31
      %s33 = sshll.u32 [#allocation4], 4
      %s34 = int_to_ptr.vmem [resolvable:$true] %s33
      %39 = dma.hbm_to_vmem [thread:$0]  %s3, 1024, %s34, [#allocation5], 64, 64, 4
    $region17: #{_residual_ffn_call.1} parent=1 // pred_fallthru
      _
    // Predicated region
    $region18: #{_residual_ffn_call.1} parent=1 // pred_check
      _
    $region19: #{_residual_ffn_call.1} parent=1 // pred_check_branch
      %41 = sbr.rel (0) target = $region21
    $region20: #{_residual_ffn_call.1} parent=1 // pred_region
      _
    $region21: #{_residual_ffn_call.1} parent=1 // pred_fallthru
      _
    // Predicated region
    $region22: #{_residual_ffn_call.1} parent=1 // pred_check
      _
    $region23: #{_residual_ffn_call.1} parent=1 // pred_check_branch
      %43 = sbr.rel (0) target = $region25
    $region24: #{_residual_ffn_call.1} parent=1 // pred_region
      %44 = dma.done [#allocation3], 1024
    $region25: #{_residual_ffn_call.1} parent=1 // pred_fallthru
      _
    // Predicated region
    $region26: #{_residual_ffn_call.1} parent=1 // pred_check
      _
    $region27: #{_residual_ffn_call.1} parent=1 // pred_check_branch
      %46 = sbr.rel (0) target = $region29
    $region28: #{_residual_ffn_call.1} parent=1 // pred_region
      %47 = dma.done [#allocation5], 1024
    $region29: #{_residual_ffn_call.1} parent=1 // pred_fallthru
      _
    %v49 = vld [vmem:[%s0] sm:$0xff]
    %v50 = vld [vmem:[%s0 + $0x8] sm:$0xff]
    %v51 = vpack.c.bf16 %v50, %v49
    %v52 = vld [vmem:[#allocation2] sm:$0xf]
    %v53 = vld [vmem:[#allocation2 + $0x4] sm:$0xf]
    %v54 = vld [vmem:[#allocation2 + $0x8] sm:$0xf]
    %v55 = vld [vmem:[#allocation2 + $0xc] sm:$0xf]
    %v56 = vld [vmem:[#allocation2 + $0x10] sm:$0xf]
    %v57 = vld [vmem:[#allocation2 + $0x14] sm:$0xf]
    %v58 = vld [vmem:[#allocation2 + $0x18] sm:$0xf]
    %v59 = vld [vmem:[#allocation2 + $0x1c] sm:$0xf]
    %v60 = vld [vmem:[#allocation2 + $0x20] sm:$0xf]
    %v61 = vld [vmem:[#allocation2 + $0x24] sm:$0xf]
    %v62 = vld [vmem:[#allocation2 + $0x28] sm:$0xf]
    %v63 = vld [vmem:[#allocation2 + $0x2c] sm:$0xf]
    %v64 = vld [vmem:[#allocation2 + $0x30] sm:$0xf]
    %v65 = vld [vmem:[#allocation2 + $0x34] sm:$0xf]
    %v66 = vld [vmem:[#allocation2 + $0x38] sm:$0xf]
    %v67 = vld [vmem:[#allocation2 + $0x3c] sm:$0xf]
    %v68 = vld [vmem:[%s2] sm:$0x1]
    %v70 = vlaneseq
    %v71 = vshrl.u32 %v70, 7
    %v72 = vsub.s32 0, %v71
    %v73 = vrot.slane %v68, %v72
    %v91 = vunpack.c.l.b16 %v52
    %v92 = vunpack.c.l.b16 %v53
    %v93 = vunpack.c.l.b16 %v54
    %v94 = vunpack.c.l.b16 %v55
    %v95 = vunpack.c.l.b16 %v56
    %v96 = vunpack.c.l.b16 %v57
    %v97 = vunpack.c.l.b16 %v58
    %v98 = vunpack.c.l.b16 %v59
    %v99 = vunpack.c.l.b16 %v60
    %v100 = vunpack.c.l.b16 %v61
    %v101 = vunpack.c.l.b16 %v62
    %v102 = vunpack.c.l.b16 %v63
    %v103 = vunpack.c.l.b16 %v64
    %v104 = vunpack.c.l.b16 %v65
    %v105 = vunpack.c.l.b16 %v66
    %v106 = vunpack.c.l.b16 %v67
    %v107 = vpack.c.b16 %v92, %v91
    %v108 = vpack.c.b16 %v94, %v93
    %v109 = vpack.c.b16 %v96, %v95
    %v110 = vpack.c.b16 %v98, %v97
    %v111 = vpack.c.b16 %v100, %v99
    %v112 = vpack.c.b16 %v102, %v101
    %v113 = vpack.c.b16 %v104, %v103
    %v114 = vpack.c.b16 %v106, %v105
    %123 = vmatprep.subr.bf16.mxu0 0
    %124 = vmatpush1.bf16.msra.mxu0 %v114
    %125 = vmatprep.subr.bf16.mxu0 0
    %126 = vmatpush1.bf16.msra.mxu0 %v113
    %127 = vmatprep.subr.bf16.mxu0 0
    %128 = vmatpush1.bf16.msra.mxu0 %v112
    %129 = vmatprep.subr.bf16.mxu0 0
    %130 = vmatpush1.bf16.msra.mxu0 %v111
    %131 = vmatprep.subr.bf16.mxu0 0
    %132 = vmatpush1.bf16.msra.mxu0 %v110
    %133 = vmatprep.subr.bf16.mxu0 0
    %134 = vmatpush1.bf16.msra.mxu0 %v109
    %135 = vmatprep.subr.bf16.mxu0 0
    %136 = vmatpush1.bf16.msra.mxu0 %v108
    %137 = vmatprep.subr.bf16.mxu0 0
    %138 = vmatpush1.bf16.msra.mxu0 %v107
    %139 = vmatprep.subr.bf16.mxu0 0
    %140 = vmatpush2.bf16.msra.mxu0 0
    %141 = vmatprep.subr.bf16.mxu0 0
    %142 = vmatpush2.bf16.msra.mxu0 0
    %143 = vmatprep.subr.bf16.mxu0 0
    %144 = vmatpush2.bf16.msra.mxu0 0
    %145 = vmatprep.subr.bf16.mxu0 0
    %146 = vmatpush2.bf16.msra.mxu0 0
    %147 = vmatprep.subr.bf16.mxu0 0
    %148 = vmatpush2.bf16.msra.mxu0 0
    %149 = vmatprep.subr.bf16.mxu0 0
    %150 = vmatpush2.bf16.msra.mxu0 0
    %151 = vmatprep.subr.bf16.mxu0 0
    %152 = vmatpush2.bf16.msra.mxu0 0
    %153 = vmatprep.subr.bf16.mxu0 0
    %154 = vmatpush2.bf16.msra.mxu0 0
    %155 = vmatprep.mubr.bf16.mxu0 0
    %156 = vmatmul.mubr.bf16.gmra.mxu0 %v51
    %v157 = vpop.f32.mrf.mxu0
    %v158 = vadd.f32 %v73, %v157
    %v159 = vpop.f32.mrf.mxu0
    %v160 = vpop.f32.mrf.mxu0
    %v161 = vadd.f32 %v73, %v160
    %v162 = vpop.f32.mrf.mxu0
    %163 = vdwg.mxu0
    %v164 = vmul.f32 %v158, %v158
    %v165 = vmul.f32 %v161, %v161
    %v166 = vmul.f32 %v158, %v164
    %v167 = vmul.f32 %v161, %v165
    %v168 = vmul.f32 %v166, 0.044715
    %v169 = vmul.f32 %v167, 0.044715
    %v170 = vadd.f32 %v158, %v168
    %v171 = vadd.f32 %v161, %v169
    %v172 = vmul.f32 %v170, 0.7978846
    %v173 = vmul.f32 %v171, 0.7978846
    %v174 = vtanh.pop %v172
    %v175 = vtanh.pop %v173
    %v176 = vadd.f32 %v174, 1.0
    %v177 = vadd.f32 %v175, 1.0
    %v178 = vmul.f32 %v176, 0.5
    %v179 = vmul.f32 %v177, 0.5
    %v180 = vmul.f32 %v158, %v178
    %v181 = vmul.f32 %v161, %v179
    %v182 = vpack.c.bf16 %v181, %v180
    %v183 = vld [vmem:[#allocation4] sm:$0xf]
    %v184 = vld [vmem:[#allocation4 + $0x4] sm:$0xf]
    %v185 = vld [vmem:[#allocation4 + $0x8] sm:$0xf]
    %v186 = vld [vmem:[#allocation4 + $0xc] sm:$0xf]
    %v187 = vld [vmem:[#allocation4 + $0x10] sm:$0xf]
    %v188 = vld [vmem:[#allocation4 + $0x14] sm:$0xf]
    %v189 = vld [vmem:[#allocation4 + $0x18] sm:$0xf]
    %v190 = vld [vmem:[#allocation4 + $0x1c] sm:$0xf]
    %v191 = vld [vmem:[#allocation4 + $0x20] sm:$0xf]
    %v192 = vld [vmem:[#allocation4 + $0x24] sm:$0xf]
    %v193 = vld [vmem:[#allocation4 + $0x28] sm:$0xf]
    %v194 = vld [vmem:[#allocation4 + $0x2c] sm:$0xf]
    %v195 = vld [vmem:[#allocation4 + $0x30] sm:$0xf]
    %v196 = vld [vmem:[#allocation4 + $0x34] sm:$0xf]
    %v197 = vld [vmem:[#allocation4 + $0x38] sm:$0xf]
    %v198 = vld [vmem:[#allocation4 + $0x3c] sm:$0xf]
    %v199 = vld [vmem:[%s4] sm:$0x1]
    %v201 = vlaneseq
    %v202 = vshrl.u32 %v201, 7
    %v203 = vsub.s32 0, %v202
    %v204 = vrot.slane %v199, %v203
    %v222 = vunpack.c.l.b16 %v183
    %v223 = vunpack.c.l.b16 %v184
    %v224 = vunpack.c.l.b16 %v185
    %v225 = vunpack.c.l.b16 %v186
    %v226 = vunpack.c.l.b16 %v187
    %v227 = vunpack.c.l.b16 %v188
    %v228 = vunpack.c.l.b16 %v189
    %v229 = vunpack.c.l.b16 %v190
    %v230 = vunpack.c.l.b16 %v191
    %v231 = vunpack.c.l.b16 %v192
    %v232 = vunpack.c.l.b16 %v193
    %v233 = vunpack.c.l.b16 %v194
    %v234 = vunpack.c.l.b16 %v195
    %v235 = vunpack.c.l.b16 %v196
    %v236 = vunpack.c.l.b16 %v197
    %v237 = vunpack.c.l.b16 %v198
    %v238 = vpack.c.b16 %v223, %v222
    %v239 = vpack.c.b16 %v225, %v224
    %v240 = vpack.c.b16 %v227, %v226
    %v241 = vpack.c.b16 %v229, %v228
    %v242 = vpack.c.b16 %v231, %v230
    %v243 = vpack.c.b16 %v233, %v232
    %v244 = vpack.c.b16 %v235, %v234
    %v245 = vpack.c.b16 %v237, %v236
    %254 = vmatprep.subr.bf16.mxu0 0
    %255 = vmatpush1.bf16.msra.mxu0 %v245
    %256 = vmatprep.subr.bf16.mxu0 0
    %257 = vmatpush1.bf16.msra.mxu0 %v244
    %258 = vmatprep.subr.bf16.mxu0 0
    %259 = vmatpush1.bf16.msra.mxu0 %v243
    %260 = vmatprep.subr.bf16.mxu0 0
    %261 = vmatpush1.bf16.msra.mxu0 %v242
    %262 = vmatprep.subr.bf16.mxu0 0
    %263 = vmatpush1.bf16.msra.mxu0 %v241
    %264 = vmatprep.subr.bf16.mxu0 0
    %265 = vmatpush1.bf16.msra.mxu0 %v240
    %266 = vmatprep.subr.bf16.mxu0 0
    %267 = vmatpush1.bf16.msra.mxu0 %v239
    %268 = vmatprep.subr.bf16.mxu0 0
    %269 = vmatpush1.bf16.msra.mxu0 %v238
    %270 = vmatprep.subr.bf16.mxu0 0
    %271 = vmatpush2.bf16.msra.mxu0 0
    %272 = vmatprep.subr.bf16.mxu0 0
    %273 = vmatpush2.bf16.msra.mxu0 0
    %274 = vmatprep.subr.bf16.mxu0 0
    %275 = vmatpush2.bf16.msra.mxu0 0
    %276 = vmatprep.subr.bf16.mxu0 0
    %277 = vmatpush2.bf16.msra.mxu0 0
    %278 = vmatprep.subr.bf16.mxu0 0
    %279 = vmatpush2.bf16.msra.mxu0 0
    %280 = vmatprep.subr.bf16.mxu0 0
    %281 = vmatpush2.bf16.msra.mxu0 0
    %282 = vmatprep.subr.bf16.mxu0 0
    %283 = vmatpush2.bf16.msra.mxu0 0
    %284 = vmatprep.subr.bf16.mxu0 0
    %285 = vmatpush2.bf16.msra.mxu0 0
    %286 = vmatprep.mubr.bf16.mxu0 0
    %287 = vmatmul.mubr.bf16.gmra.mxu0 %v182
    %v288 = vpop.f32.mrf.mxu0
    %v289 = vadd.f32 %v204, %v288
    %v290 = vpop.f32.mrf.mxu0
    %v291 = vpop.f32.mrf.mxu0
    %v292 = vadd.f32 %v204, %v291
    %v293 = vpop.f32.mrf.mxu0
    %294 = vdwg.mxu0
    %v295 = vadd.f32 %v289, %v49
    %v296 = vadd.f32 %v292, %v50
    %297 = vst [vmem:[%s5] sm:$0xff] %v295
    %298 = vst [vmem:[%s5 + $0x8] sm:$0xff] %v296
    // Predicated region
    $region30: #{_residual_ffn_call.1} parent=1 // pred_check
      _
    $region31: #{_residual_ffn_call.1} parent=1 // pred_check_branch
      %300 = sbr.rel (0) target = $region33
    $region32: #{_residual_ffn_call.1} parent=1 // pred_region
      _
    $region33: #{_residual_ffn_call.1} parent=1 // pred_fallthru
      _
    // Predicated region
    $region34: #{_residual_ffn_call.1} parent=1 // pred_check
      _
    $region35: #{_residual_ffn_call.1} parent=1 // pred_check_branch
      %302 = sbr.rel (0) target = $region37
    $region36: #{_residual_ffn_call.1} parent=1 // pred_region
      _
    $region37: #{_residual_ffn_call.1} parent=1 // pred_fallthru
      _
    %303 = vsyncpa [#allocation3], 1
    %304 = vsyncpa [#allocation5], 1

</llo_original>
